<compile_context>
chip_gen: v7x
topology: tpu7x:2x2x1
jax: 0.10.0
libtpu: 0.0.40
codegen_flags: <defaults>
</compile_context>

<pallas_src>
import numpy as np
import jax
import jax.numpy as jnp
from jax.experimental import pallas as pl
from jax.experimental.pallas import tpu as pltpu

FC_PARAM = (4, 32, 32, 12)
X_DIM = FC_PARAM[0]
H1 = FC_PARAM[1]
H2 = FC_PARAM[2]
OUT_DIM = FC_PARAM[3]
U_DIM = (FC_PARAM[-1] - FC_PARAM[0]) // FC_PARAM[0]

_SQRT1_2 = float(1.0 / np.sqrt(2.0))


def _erf(x):
    # Abramowitz & Stegun 7.1.26, |abs err| < 1.5e-7 (~f32 eps).
    a1, a2, a3, a4, a5 = (0.254829592, -0.284496736, 1.421413741,
                          -1.453152027, 1.061405429)
    p = 0.3275911
    s = jnp.where(x >= 0.0, 1.0, -1.0)
    z = jnp.abs(x)
    d = 1.0 + p * z
    # EUP approximate reciprocal + one Newton step: moves the divide off the
    # VALU chain (EUP slot is otherwise idle) while keeping ~f32 accuracy.
    r = pl.reciprocal(d, approx=True)
    t = r * (2.0 - d * r)
    poly = ((((a5 * t + a4) * t + a3) * t + a2) * t + a1) * t
    return s * (1.0 - poly * jnp.exp(-z * z))


def _gelu_exact(x):
    # torch.nn.GELU() default (approximate='none'): 0.5*x*(1+erf(x/sqrt(2)))
    return 0.5 * x * (1.0 + _erf(x * _SQRT1_2))


def clf_kernel(x_ref, u_ref, w1_ref, b1_ref, w2_ref, b2_ref,
               w3f_ref, b3f_ref, w3g_ref, b3g_ref, o_ref):
    # Feature-major: activations are [features, TB]; lane dim (TB) is dense.
    h = jnp.dot(w1_ref[...], x_ref[...], preferred_element_type=jnp.float32)
    h = _gelu_exact(h + b1_ref[...])                          # [H1, TB]
    h = jnp.dot(w2_ref[...], h, preferred_element_type=jnp.float32)
    h = _gelu_exact(h + b2_ref[...])                          # [H2, TB]

    # out = fx + u @ Gx, with the last Linear pre-split (wrapper) into an fx
    # part and per-u gx parts so no unaligned slices of the net output occur.
    out = jnp.dot(w3f_ref[...], h,
                  preferred_element_type=jnp.float32) + b3f_ref[...]   # [X_DIM, TB]
    u = u_ref[...]                                            # [U_DIM, TB]
    for j in range(U_DIM):                                    # static unroll
        gx_j = jnp.dot(w3g_ref[j], h,
                       preferred_element_type=jnp.float32) + b3g_ref[j]
        out = out + u[j:j + 1, :] * gx_j
    o_ref[...] = out.astype(o_ref.dtype)


def _round_up(n, m):
    return ((n + m - 1) // m) * m


def _prep_kernel_params(params):
    """[in,out]-layout params -> feature-major kernel operands."""
    (w1, b1), (w2, b2), (w3, b3) = params
    w1t = jnp.asarray(w1, jnp.float32).T                      # [H1, X_DIM]
    w2t = jnp.asarray(w2, jnp.float32).T                      # [H2, H1]
    w3t = jnp.asarray(w3, jnp.float32).T                      # [OUT_DIM, H2]
    b1c = jnp.asarray(b1, jnp.float32).reshape(H1, 1)
    b2c = jnp.asarray(b2, jnp.float32).reshape(H2, 1)
    b3c = jnp.asarray(b3, jnp.float32).reshape(OUT_DIM, 1)
    w3f, b3f = w3t[:X_DIM], b3c[:X_DIM]                       # fx part
    w3g = w3t[X_DIM:].reshape(U_DIM, X_DIM, H2)               # gx parts
    b3g = b3c[X_DIM:].reshape(U_DIM, X_DIM, 1)
    return w1t, b1c, w2t, b2c, w3f, b3f, w3g, b3g


def clf_forward(x, u, params, *, tb_max=8192):
    """Training-mode path: x [B,1,x_dim], u [B,1,u_dim] -> out [B,1,x_dim]."""
    B = x.shape[0]
    TB = min(tb_max, _round_up(B, 128))      # lane-dense tile (multiple of 128)
    Bp = _round_up(B, TB)                    # pad ragged batch in the wrapper
    n_tiles = Bp // TB

    xT = jnp.zeros((X_DIM, Bp), jnp.float32).at[:, :B].set(
        x.reshape(B, X_DIM).astype(jnp.float32).T)
    uT = jnp.zeros((U_DIM, Bp), jnp.float32).at[:, :B].set(
        u.reshape(B, U_DIM).astype(jnp.float32).T)

    w1t, b1c, w2t, b2c, w3f, b3f, w3g, b3g = _prep_kernel_params(params)
    args = (xT, uT, w1t, b1c, w2t, b2c, w3f, b3f, w3g, b3g)

    def tile_spec(feat):
        # Streamed per grid step along the batch (lane) axis.
        return pl.BlockSpec((feat, TB), lambda i: (0, i))

    def resident_spec(a):
        # Full-extent block, same index every step -> stays in VMEM.
        nd = a.ndim
        return pl.BlockSpec(a.shape, lambda i, nd=nd: (0,) * nd)

    in_specs = [tile_spec(X_DIM), tile_spec(U_DIM)] + [
        resident_spec(a) for a in args[2:]]

    n_w = sum(int(np.prod(a.shape)) for a in args[2:])
    cost = pl.CostEstimate(
        flops=2 * Bp * (X_DIM * H1 + H1 * H2 + H2 * OUT_DIM)
              + 4 * Bp * U_DIM * X_DIM,
        transcendentals=2 * Bp * (H1 + H2),                   # exp + rcp / GELU
        bytes_accessed=4 * (Bp * (2 * X_DIM + U_DIM) + n_w),
    )

    outT = pl.pallas_call(
        clf_kernel,
        out_shape=jax.ShapeDtypeStruct((X_DIM, Bp), jnp.float32),
        grid=(n_tiles,),
        in_specs=in_specs,
        out_specs=pl.BlockSpec((X_DIM, TB), lambda i: (0, i)),
        compiler_params=pltpu.CompilerParams(
            dimension_semantics=("parallel",)),
        cost_estimate=cost,
    )(*args)
    return outT[:, :B].T.reshape(B, 1, X_DIM)


def init_params(key):
    # PyTorch init: nn.init.normal_(weight, mean=0, std=0.1); bias = 0.
    # Weights kept in [in, out] ("math") layout; wrapper transposes/splits.
    params = []
    keys = jax.random.split(key, len(FC_PARAM) - 1)
    for i, k in enumerate(keys):
        fan_in, fan_out = FC_PARAM[i], FC_PARAM[i + 1]
        w = 0.1 * jax.random.normal(k, (fan_in, fan_out), dtype=jnp.float32)
        b = jnp.zeros((fan_out,), dtype=jnp.float32)
        params.append((w, b))
    return params


def clf_reference(x, u, params):
    # Pure-JAX reference mirroring the PyTorch training-mode forward.
    B = x.shape[0]
    h = x.reshape(B, X_DIM)
    for (w, b) in params[:-1]:
        h = jax.nn.gelu(h @ w + b, approximate=False)
    w, b = params[-1]
    net_out = h @ w + b
    fx = net_out[:, :X_DIM]
    gx = net_out[:, X_DIM:].reshape(B, U_DIM, X_DIM)
    out = fx + jnp.einsum('bu,bux->bx', u.reshape(B, U_DIM), gx)
    return out.reshape(B, 1, X_DIM)


# TODO(synk): dCLF() / cvx_solver() run a cvxopt QP on host — iterative CPU
# solver, no Pallas equivalent; only the neural forward pass (training-mode
# branch of CLF.forward) is implemented here.

if __name__ == "__main__":
    key = jax.random.PRNGKey(0)
    params = init_params(jax.random.fold_in(key, 0))

    # Small demo shape (B=2), plus a multi-tile case exercising the batch grid
    # pipeline + ragged-batch padding (B=300, TB=128 -> 3 grid steps).
    for B, tb_max in ((2, 8192), (300, 128)):
        kx, ku = jax.random.split(jax.random.fold_in(key, B))
        x = jax.random.normal(kx, (B, 1, X_DIM), dtype=jnp.float32)
        u = jax.random.normal(ku, (B, 1, U_DIM), dtype=jnp.float32)

        out = jax.block_until_ready(clf_forward(x, u, params, tb_max=tb_max))
        ref = clf_reference(x, u, params)

        assert out.shape == (B, 1, X_DIM), out.shape
        np.testing.assert_allclose(np.asarray(out), np.asarray(ref),
                                   atol=1e-4, rtol=1e-3)
    print("KERNEL_OK")
</pallas_src>

<mosaic_0001>
module attributes {stable_mosaic.version = 11 : i64} {
  func.func @clf_kernel(%arg0: i32, %arg1: memref<4x128xf32, #tpu.memory_space<vmem>>, %arg2: memref<2x128xf32, #tpu.memory_space<vmem>>, %arg3: memref<32x4xf32, #tpu.memory_space<vmem>>, %arg4: memref<32x1xf32, #tpu.memory_space<vmem>>, %arg5: memref<32x32xf32, #tpu.memory_space<vmem>>, %arg6: memref<32x1xf32, #tpu.memory_space<vmem>>, %arg7: memref<4x32xf32, #tpu.memory_space<vmem>>, %arg8: memref<4x1xf32, #tpu.memory_space<vmem>>, %arg9: memref<2x4x32xf32, #tpu.memory_space<vmem>>, %arg10: memref<2x4x1xf32, #tpu.memory_space<vmem>>, %arg11: memref<4x128xf32, #tpu.memory_space<vmem>>) attributes {dimension_semantics = [#tpu.dimension_semantics<parallel>], iteration_bounds = array<i64: 1>, scalar_prefetch = 0 : i64, scratch_operands = 0 : i64, tpu.core_type = #tpu.core_type<tc>, window_params = [{transform_indices = @transform_0, window_bounds = array<i64: 4, 128>}, {transform_indices = @transform_1, window_bounds = array<i64: 2, 128>}, {pipeline_mode = #tpu.pipeline_mode<synchronous>, transform_indices = @transform_2, window_bounds = array<i64: 32, 4>}, {pipeline_mode = #tpu.pipeline_mode<synchronous>, transform_indices = @transform_3, window_bounds = array<i64: 32, 1>}, {pipeline_mode = #tpu.pipeline_mode<synchronous>, transform_indices = @transform_4, window_bounds = array<i64: 32, 32>}, {pipeline_mode = #tpu.pipeline_mode<synchronous>, transform_indices = @transform_5, window_bounds = array<i64: 32, 1>}, {pipeline_mode = #tpu.pipeline_mode<synchronous>, transform_indices = @transform_6, window_bounds = array<i64: 4, 32>}, {pipeline_mode = #tpu.pipeline_mode<synchronous>, transform_indices = @transform_7, window_bounds = array<i64: 4, 1>}, {pipeline_mode = #tpu.pipeline_mode<synchronous>, transform_indices = @transform_8, window_bounds = array<i64: 2, 4, 32>}, {pipeline_mode = #tpu.pipeline_mode<synchronous>, transform_indices = @transform_9, window_bounds = array<i64: 2, 4, 1>}, {transform_indices = @transform_10, window_bounds = array<i64: 4, 128>}]} {
    %c0 = arith.constant 0 : index
    %c0_0 = arith.constant 0 : index
    %0 = vector.load %arg3[%c0, %c0_0] : memref<32x4xf32, #tpu.memory_space<vmem>>, vector<32x4xf32>
    %c0_1 = arith.constant 0 : index
    %c0_2 = arith.constant 0 : index
    %1 = vector.load %arg1[%c0_1, %c0_2] : memref<4x128xf32, #tpu.memory_space<vmem>>, vector<4x128xf32>
    %cst = arith.constant dense<0.000000e+00> : vector<32x128xf32>
    %2 = tpu.matmul %0, %1, %cst {dimension_numbers = #tpu.dot_dimension_numbers<[1], [0], [0], [1], [0, 0, 1, 1], [], []>} : vector<32x4xf32>, vector<4x128xf32>, vector<32x128xf32> -> vector<32x128xf32>
    %c0_3 = arith.constant 0 : index
    %c0_4 = arith.constant 0 : index
    %3 = vector.load %arg4[%c0_3, %c0_4] : memref<32x1xf32, #tpu.memory_space<vmem>>, vector<32x1xf32>
    %4 = vector.broadcast %3 : vector<32x1xf32> to vector<32x128xf32>
    %5 = arith.addf %2, %4 : vector<32x128xf32>
    %cst_5 = arith.constant 5.000000e-01 : f32
    %6 = vector.broadcast %cst_5 : f32 to vector<32x128xf32>
    %7 = arith.mulf %6, %5 : vector<32x128xf32>
    %cst_6 = arith.constant 0.707106769 : f32
    %8 = vector.broadcast %cst_6 : f32 to vector<32x128xf32>
    %9 = arith.mulf %5, %8 : vector<32x128xf32>
    %cst_7 = arith.constant 0.000000e+00 : f32
    %10 = vector.broadcast %cst_7 : f32 to vector<32x128xf32>
    %11 = arith.cmpf oge, %9, %10 : vector<32x128xf32>
    %cst_8 = arith.constant 1.000000e+00 : f32
    %cst_9 = arith.constant -1.000000e+00 : f32
    %12 = vector.broadcast %cst_8 : f32 to vector<32x128xf32>
    %13 = vector.broadcast %cst_9 : f32 to vector<32x128xf32>
    %14 = arith.select %11, %12, %13 : vector<32x128xi1>, vector<32x128xf32>
    %15 = math.absf %9 : vector<32x128xf32>
    %cst_10 = arith.constant 0.327591091 : f32
    %16 = vector.broadcast %cst_10 : f32 to vector<32x128xf32>
    %17 = arith.mulf %16, %15 : vector<32x128xf32>
    %cst_11 = arith.constant 1.000000e+00 : f32
    %18 = vector.broadcast %cst_11 : f32 to vector<32x128xf32>
    %19 = arith.addf %18, %17 : vector<32x128xf32>
    %20 = tpu.reciprocal %19 {approx = true} : vector<32x128xf32> -> vector<32x128xf32>
    %21 = arith.mulf %19, %20 : vector<32x128xf32>
    %cst_12 = arith.constant 2.000000e+00 : f32
    %22 = vector.broadcast %cst_12 : f32 to vector<32x128xf32>
    %23 = arith.subf %22, %21 : vector<32x128xf32>
    %24 = arith.mulf %20, %23 : vector<32x128xf32>
    %cst_13 = arith.constant 1.06140542 : f32
    %25 = vector.broadcast %cst_13 : f32 to vector<32x128xf32>
    %26 = arith.mulf %25, %24 : vector<32x128xf32>
    %cst_14 = arith.constant -1.45315206 : f32
    %27 = vector.broadcast %cst_14 : f32 to vector<32x128xf32>
    %28 = arith.addf %26, %27 : vector<32x128xf32>
    %29 = arith.mulf %28, %24 : vector<32x128xf32>
    %cst_15 = arith.constant 1.42141378 : f32
    %30 = vector.broadcast %cst_15 : f32 to vector<32x128xf32>
    %31 = arith.addf %29, %30 : vector<32x128xf32>
    %32 = arith.mulf %31, %24 : vector<32x128xf32>
    %cst_16 = arith.constant -0.284496725 : f32
    %33 = vector.broadcast %cst_16 : f32 to vector<32x128xf32>
    %34 = arith.addf %32, %33 : vector<32x128xf32>
    %35 = arith.mulf %34, %24 : vector<32x128xf32>
    %cst_17 = arith.constant 0.254829586 : f32
    %36 = vector.broadcast %cst_17 : f32 to vector<32x128xf32>
    %37 = arith.addf %35, %36 : vector<32x128xf32>
    %38 = arith.mulf %37, %24 : vector<32x128xf32>
    %cst_18 = arith.constant 0.000000e+00 : f32
    %39 = vector.broadcast %cst_18 : f32 to vector<32x128xf32>
    %40 = arith.subf %39, %15 : vector<32x128xf32>
    %41 = arith.mulf %40, %15 : vector<32x128xf32>
    %42 = math.exp %41 : vector<32x128xf32>
    %43 = arith.mulf %38, %42 : vector<32x128xf32>
    %cst_19 = arith.constant 1.000000e+00 : f32
    %44 = vector.broadcast %cst_19 : f32 to vector<32x128xf32>
    %45 = arith.subf %44, %43 : vector<32x128xf32>
    %46 = arith.mulf %14, %45 : vector<32x128xf32>
    %cst_20 = arith.constant 1.000000e+00 : f32
    %47 = vector.broadcast %cst_20 : f32 to vector<32x128xf32>
    %48 = arith.addf %47, %46 : vector<32x128xf32>
    %49 = arith.mulf %7, %48 : vector<32x128xf32>
    %c0_21 = arith.constant 0 : index
    %c0_22 = arith.constant 0 : index
    %50 = vector.load %arg5[%c0_21, %c0_22] : memref<32x32xf32, #tpu.memory_space<vmem>>, vector<32x32xf32>
    %cst_23 = arith.constant dense<0.000000e+00> : vector<32x128xf32>
    %51 = tpu.matmul %50, %49, %cst_23 {dimension_numbers = #tpu.dot_dimension_numbers<[1], [0], [0], [1], [0, 0, 1, 1], [], []>} : vector<32x32xf32>, vector<32x128xf32>, vector<32x128xf32> -> vector<32x128xf32>
    %c0_24 = arith.constant 0 : index
    %c0_25 = arith.constant 0 : index
    %52 = vector.load %arg6[%c0_24, %c0_25] : memref<32x1xf32, #tpu.memory_space<vmem>>, vector<32x1xf32>
    %53 = vector.broadcast %52 : vector<32x1xf32> to vector<32x128xf32>
    %54 = arith.addf %51, %53 : vector<32x128xf32>
    %cst_26 = arith.constant 5.000000e-01 : f32
    %55 = vector.broadcast %cst_26 : f32 to vector<32x128xf32>
    %56 = arith.mulf %55, %54 : vector<32x128xf32>
    %cst_27 = arith.constant 0.707106769 : f32
    %57 = vector.broadcast %cst_27 : f32 to vector<32x128xf32>
    %58 = arith.mulf %54, %57 : vector<32x128xf32>
    %cst_28 = arith.constant 0.000000e+00 : f32
    %59 = vector.broadcast %cst_28 : f32 to vector<32x128xf32>
    %60 = arith.cmpf oge, %58, %59 : vector<32x128xf32>
    %cst_29 = arith.constant 1.000000e+00 : f32
    %cst_30 = arith.constant -1.000000e+00 : f32
    %61 = vector.broadcast %cst_29 : f32 to vector<32x128xf32>
    %62 = vector.broadcast %cst_30 : f32 to vector<32x128xf32>
    %63 = arith.select %60, %61, %62 : vector<32x128xi1>, vector<32x128xf32>
    %64 = math.absf %58 : vector<32x128xf32>
    %cst_31 = arith.constant 0.327591091 : f32
    %65 = vector.broadcast %cst_31 : f32 to vector<32x128xf32>
    %66 = arith.mulf %65, %64 : vector<32x128xf32>
    %cst_32 = arith.constant 1.000000e+00 : f32
    %67 = vector.broadcast %cst_32 : f32 to vector<32x128xf32>
    %68 = arith.addf %67, %66 : vector<32x128xf32>
    %69 = tpu.reciprocal %68 {approx = true} : vector<32x128xf32> -> vector<32x128xf32>
    %70 = arith.mulf %68, %69 : vector<32x128xf32>
    %cst_33 = arith.constant 2.000000e+00 : f32
    %71 = vector.broadcast %cst_33 : f32 to vector<32x128xf32>
    %72 = arith.subf %71, %70 : vector<32x128xf32>
    %73 = arith.mulf %69, %72 : vector<32x128xf32>
    %cst_34 = arith.constant 1.06140542 : f32
    %74 = vector.broadcast %cst_34 : f32 to vector<32x128xf32>
    %75 = arith.mulf %74, %73 : vector<32x128xf32>
    %cst_35 = arith.constant -1.45315206 : f32
    %76 = vector.broadcast %cst_35 : f32 to vector<32x128xf32>
    %77 = arith.addf %75, %76 : vector<32x128xf32>
    %78 = arith.mulf %77, %73 : vector<32x128xf32>
    %cst_36 = arith.constant 1.42141378 : f32
    %79 = vector.broadcast %cst_36 : f32 to vector<32x128xf32>
    %80 = arith.addf %78, %79 : vector<32x128xf32>
    %81 = arith.mulf %80, %73 : vector<32x128xf32>
    %cst_37 = arith.constant -0.284496725 : f32
    %82 = vector.broadcast %cst_37 : f32 to vector<32x128xf32>
    %83 = arith.addf %81, %82 : vector<32x128xf32>
    %84 = arith.mulf %83, %73 : vector<32x128xf32>
    %cst_38 = arith.constant 0.254829586 : f32
    %85 = vector.broadcast %cst_38 : f32 to vector<32x128xf32>
    %86 = arith.addf %84, %85 : vector<32x128xf32>
    %87 = arith.mulf %86, %73 : vector<32x128xf32>
    %cst_39 = arith.constant 0.000000e+00 : f32
    %88 = vector.broadcast %cst_39 : f32 to vector<32x128xf32>
    %89 = arith.subf %88, %64 : vector<32x128xf32>
    %90 = arith.mulf %89, %64 : vector<32x128xf32>
    %91 = math.exp %90 : vector<32x128xf32>
    %92 = arith.mulf %87, %91 : vector<32x128xf32>
    %cst_40 = arith.constant 1.000000e+00 : f32
    %93 = vector.broadcast %cst_40 : f32 to vector<32x128xf32>
    %94 = arith.subf %93, %92 : vector<32x128xf32>
    %95 = arith.mulf %63, %94 : vector<32x128xf32>
    %cst_41 = arith.constant 1.000000e+00 : f32
    %96 = vector.broadcast %cst_41 : f32 to vector<32x128xf32>
    %97 = arith.addf %96, %95 : vector<32x128xf32>
    %98 = arith.mulf %56, %97 : vector<32x128xf32>
    %c0_42 = arith.constant 0 : index
    %c0_43 = arith.constant 0 : index
    %99 = vector.load %arg7[%c0_42, %c0_43] : memref<4x32xf32, #tpu.memory_space<vmem>>, vector<4x32xf32>
    %cst_44 = arith.constant dense<0.000000e+00> : vector<4x128xf32>
    %100 = tpu.matmul %99, %98, %cst_44 {dimension_numbers = #tpu.dot_dimension_numbers<[1], [0], [0], [1], [0, 0, 1, 1], [], []>} : vector<4x32xf32>, vector<32x128xf32>, vector<4x128xf32> -> vector<4x128xf32>
    %c0_45 = arith.constant 0 : index
    %c0_46 = arith.constant 0 : index
    %101 = vector.load %arg8[%c0_45, %c0_46] : memref<4x1xf32, #tpu.memory_space<vmem>>, vector<4x1xf32>
    %102 = vector.broadcast %101 : vector<4x1xf32> to vector<4x128xf32>
    %103 = arith.addf %100, %102 : vector<4x128xf32>
    %c0_47 = arith.constant 0 : index
    %c0_48 = arith.constant 0 : index
    %104 = vector.load %arg2[%c0_47, %c0_48] : memref<2x128xf32, #tpu.memory_space<vmem>>, vector<2x128xf32>
    %c0_49 = arith.constant 0 : index
    %c0_50 = arith.constant 0 : index
    %c0_51 = arith.constant 0 : index
    %105 = vector.load %arg9[%c0_49, %c0_50, %c0_51] : memref<2x4x32xf32, #tpu.memory_space<vmem>>, vector<1x4x32xf32>
    %106 = vector.shape_cast %105 : vector<1x4x32xf32> to vector<4x32xf32>
    %cst_52 = arith.constant dense<0.000000e+00> : vector<4x128xf32>
    %107 = tpu.matmul %106, %98, %cst_52 {dimension_numbers = #tpu.dot_dimension_numbers<[1], [0], [0], [1], [0, 0, 1, 1], [], []>} : vector<4x32xf32>, vector<32x128xf32>, vector<4x128xf32> -> vector<4x128xf32>
    %c0_53 = arith.constant 0 : index
    %c0_54 = arith.constant 0 : index
    %c0_55 = arith.constant 0 : index
    %108 = vector.load %arg10[%c0_53, %c0_54, %c0_55] : memref<2x4x1xf32, #tpu.memory_space<vmem>>, vector<1x4x1xf32>
    %109 = vector.shape_cast %108 : vector<1x4x1xf32> to vector<4x1xf32>
    %110 = vector.broadcast %109 : vector<4x1xf32> to vector<4x128xf32>
    %111 = arith.addf %107, %110 : vector<4x128xf32>
    %112 = vector.extract_strided_slice %104 {offsets = [0, 0], sizes = [1, 128], strides = [1, 1]} : vector<2x128xf32> to vector<1x128xf32>
    %113 = vector.broadcast %112 : vector<1x128xf32> to vector<4x128xf32>
    %114 = arith.mulf %113, %111 : vector<4x128xf32>
    %115 = arith.addf %103, %114 : vector<4x128xf32>
    %c1 = arith.constant 1 : index
    %c0_56 = arith.constant 0 : index
    %c0_57 = arith.constant 0 : index
    %116 = vector.load %arg9[%c1, %c0_56, %c0_57] : memref<2x4x32xf32, #tpu.memory_space<vmem>>, vector<1x4x32xf32>
    %117 = vector.shape_cast %116 : vector<1x4x32xf32> to vector<4x32xf32>
    %cst_58 = arith.constant dense<0.000000e+00> : vector<4x128xf32>
    %118 = tpu.matmul %117, %98, %cst_58 {dimension_numbers = #tpu.dot_dimension_numbers<[1], [0], [0], [1], [0, 0, 1, 1], [], []>} : vector<4x32xf32>, vector<32x128xf32>, vector<4x128xf32> -> vector<4x128xf32>
    %c1_59 = arith.constant 1 : index
    %c0_60 = arith.constant 0 : index
    %c0_61 = arith.constant 0 : index
    %119 = vector.load %arg10[%c1_59, %c0_60, %c0_61] : memref<2x4x1xf32, #tpu.memory_space<vmem>>, vector<1x4x1xf32>
    %120 = vector.shape_cast %119 : vector<1x4x1xf32> to vector<4x1xf32>
    %121 = vector.broadcast %120 : vector<4x1xf32> to vector<4x128xf32>
    %122 = arith.addf %118, %121 : vector<4x128xf32>
    %123 = vector.extract_strided_slice %104 {offsets = [1, 0], sizes = [1, 128], strides = [1, 1]} : vector<2x128xf32> to vector<1x128xf32>
    %124 = vector.broadcast %123 : vector<1x128xf32> to vector<4x128xf32>
    %125 = arith.mulf %124, %122 : vector<4x128xf32>
    %126 = arith.addf %115, %125 : vector<4x128xf32>
    %c0_62 = arith.constant 0 : index
    %c0_63 = arith.constant 0 : index
    %127 = vector.load %arg11[%c0_62, %c0_63] : memref<4x128xf32, #tpu.memory_space<vmem>>, vector<4x128xf32>
    tpu.vector_store %arg11[%c0_62, %c0_63], %126 {strides = array<i32>} : memref<4x128xf32, #tpu.memory_space<vmem>>, vector<4x128xf32>,
    return
  }
  func.func @transform_0(%arg0: i32) -> (i32, i32) {
    %c0_i32 = arith.constant 0 : i32
    %c0_i32_0 = arith.constant 0 : i32
    return %c0_i32, %arg0 : i32, i32
  }
  func.func @transform_1(%arg0: i32) -> (i32, i32) {
    %c0_i32 = arith.constant 0 : i32
    %c0_i32_0 = arith.constant 0 : i32
    return %c0_i32, %arg0 : i32, i32
  }
  func.func @transform_2(%arg0: i32) -> (i32, i32) {
    %c0_i32 = arith.constant 0 : i32
    %c0_i32_0 = arith.constant 0 : i32
    %c0_i32_1 = arith.constant 0 : i32
    return %c0_i32, %c0_i32_0 : i32, i32
  }
  func.func @transform_3(%arg0: i32) -> (i32, i32) {
    %c0_i32 = arith.constant 0 : i32
    %c0_i32_0 = arith.constant 0 : i32
    %c0_i32_1 = arith.constant 0 : i32
    return %c0_i32, %c0_i32_0 : i32, i32
  }
  func.func @transform_4(%arg0: i32) -> (i32, i32) {
    %c0_i32 = arith.constant 0 : i32
    %c0_i32_0 = arith.constant 0 : i32
    %c0_i32_1 = arith.constant 0 : i32
    return %c0_i32, %c0_i32_0 : i32, i32
  }
  func.func @transform_5(%arg0: i32) -> (i32, i32) {
    %c0_i32 = arith.constant 0 : i32
    %c0_i32_0 = arith.constant 0 : i32
    %c0_i32_1 = arith.constant 0 : i32
    return %c0_i32, %c0_i32_0 : i32, i32
  }
  func.func @transform_6(%arg0: i32) -> (i32, i32) {
    %c0_i32 = arith.constant 0 : i32
    %c0_i32_0 = arith.constant 0 : i32
    %c0_i32_1 = arith.constant 0 : i32
    return %c0_i32, %c0_i32_0 : i32, i32
  }
  func.func @transform_7(%arg0: i32) -> (i32, i32) {
    %c0_i32 = arith.constant 0 : i32
    %c0_i32_0 = arith.constant 0 : i32
    %c0_i32_1 = arith.constant 0 : i32
    return %c0_i32, %c0_i32_0 : i32, i32
  }
  func.func @transform_8(%arg0: i32) -> (i32, i32, i32) {
    %c0_i32 = arith.constant 0 : i32
    %c0_i32_0 = arith.constant 0 : i32
    %c0_i32_1 = arith.constant 0 : i32
    %c0_i32_2 = arith.constant 0 : i32
    return %c0_i32, %c0_i32_0, %c0_i32_1 : i32, i32, i32
  }
  func.func @transform_9(%arg0: i32) -> (i32, i32, i32) {
    %c0_i32 = arith.constant 0 : i32
    %c0_i32_0 = arith.constant 0 : i32
    %c0_i32_1 = arith.constant 0 : i32
    %c0_i32_2 = arith.constant 0 : i32
    return %c0_i32, %c0_i32_0, %c0_i32_1 : i32, i32, i32
  }
  func.func @transform_10(%arg0: i32) -> (i32, i32) {
    %c0_i32 = arith.constant 0 : i32
    %c0_i32_0 = arith.constant 0 : i32
    return %c0_i32, %arg0 : i32, i32
  }
}

</mosaic_0001>

<llo_original>
// kernel: tpu_custom_call.1
$region0: #{tpu_custom_call.1}
  #allocation0 [shape = 'u32[]', space=smem, size = 0x4, offset = 0x4, fixed_abs, tag = 'smem constant byte address 0x4 - core index']
  #allocation1 [shape = 'u32[144,128]{1,0:T(1,128)}', space=vmem, size = 0x12000, scoped, tag = 'internal scratch']
  %s0 = inlined_call_operand.vmem [shape: f32[4,128], index: 0, kind: input, shape index: {}]
  %s1 = inlined_call_operand.vmem [shape: f32[2,128], index: 1, kind: input, shape index: {}]
  %s2 = inlined_call_operand.vmem [shape: f32[32,4], index: 2, kind: input, shape index: {}]
  %s3 = inlined_call_operand.vmem [shape: f32[32,1], index: 3, kind: input, shape index: {}]
  %s4 = inlined_call_operand.vmem [shape: f32[32,32], index: 4, kind: input, shape index: {}]
  %s5 = inlined_call_operand.vmem [shape: f32[32,1], index: 5, kind: input, shape index: {}]
  %s6 = inlined_call_operand.vmem [shape: f32[4,32], index: 6, kind: input, shape index: {}]
  %s7 = inlined_call_operand.vmem [shape: f32[4,1], index: 7, kind: input, shape index: {}]
  %s8 = inlined_call_operand.vmem [shape: f32[2,4,32], index: 8, kind: input, shape index: {}]
  %s9 = inlined_call_operand.vmem [shape: f32[2,4,1], index: 9, kind: input, shape index: {}]
  %s10 = inlined_call_operand.hbm [shape: f32[4,128], index: 10, kind: output, shape index: {}]
  %s11 = sld [smem:[#allocation0]]
  $region50: #{tpu_custom_call.1} parent=0
    _
  %s13 = ssub.s32 1, %s11
  %s14 = scalar_select 0, %s13, %s11
  $region1: #{tpu_custom_call.1} parent=0
    #allocation2 [shape = 'u8[2048]{0}', space=vmem, size = 0x800, scoped, tag = 'output window, operand 0, single buffered']
    #allocation3 [shape = 's32[1]{0}', space=sflag, size = 0x4, scoped, tag = 'scoped memory for tpu_custom_call.1']
    %15 = vsyncpa [#allocation3], 0
    // Predicated region
    $region2: #{tpu_custom_call.1} parent=1 // pred_check
      _
    $region3: #{tpu_custom_call.1} parent=1 // pred_check_branch
      %17 = sbr.rel (0) target = $region5
    $region4: #{tpu_custom_call.1} parent=1 // pred_region
      _
    $region5: #{tpu_custom_call.1} parent=1 // pred_fallthru
      _
    // Predicated region
    $region6: #{tpu_custom_call.1} parent=1 // pred_check
      _
    $region7: #{tpu_custom_call.1} parent=1 // pred_check_branch
      %19 = sbr.rel (0) target = $region9
    $region8: #{tpu_custom_call.1} parent=1 // pred_region
      _
    $region9: #{tpu_custom_call.1} parent=1 // pred_fallthru
      _
    // Predicated region
    $region10: #{tpu_custom_call.1} parent=1 // pred_check
      _
    $region11: #{tpu_custom_call.1} parent=1 // pred_check_branch
      %21 = sbr.rel (0) target = $region13
    $region12: #{tpu_custom_call.1} parent=1 // pred_region
      _
    $region13: #{tpu_custom_call.1} parent=1 // pred_fallthru
      _
    // Predicated region
    $region14: #{tpu_custom_call.1} parent=1 // pred_check
      _
    $region15: #{tpu_custom_call.1} parent=1 // pred_check_branch
      %23 = sbr.rel (0) target = $region17
    $region16: #{tpu_custom_call.1} parent=1 // pred_region
      _
    $region17: #{tpu_custom_call.1} parent=1 // pred_fallthru
      _
    // Predicated region
    $region18: #{tpu_custom_call.1} parent=1 // pred_check
      _
    $region19: #{tpu_custom_call.1} parent=1 // pred_check_branch
      %25 = sbr.rel (0) target = $region21
    $region20: #{tpu_custom_call.1} parent=1 // pred_region
      _
    $region21: #{tpu_custom_call.1} parent=1 // pred_fallthru
      _
    // Predicated region
    $region22: #{tpu_custom_call.1} parent=1 // pred_check
      _
    $region23: #{tpu_custom_call.1} parent=1 // pred_check_branch
      %27 = sbr.rel (0) target = $region25
    $region24: #{tpu_custom_call.1} parent=1 // pred_region
      _
    $region25: #{tpu_custom_call.1} parent=1 // pred_fallthru
      _
    // Predicated region
    $region26: #{tpu_custom_call.1} parent=1 // pred_check
      _
    $region27: #{tpu_custom_call.1} parent=1 // pred_check_branch
      %29 = sbr.rel (0) target = $region29
    $region28: #{tpu_custom_call.1} parent=1 // pred_region
      _
    $region29: #{tpu_custom_call.1} parent=1 // pred_fallthru
      _
    // Predicated region
    $region30: #{tpu_custom_call.1} parent=1 // pred_check
      _
    $region31: #{tpu_custom_call.1} parent=1 // pred_check_branch
      %31 = sbr.rel (0) target = $region33
    $region32: #{tpu_custom_call.1} parent=1 // pred_region
      _
    $region33: #{tpu_custom_call.1} parent=1 // pred_fallthru
      _
    // Predicated region
    $region34: #{tpu_custom_call.1} parent=1 // pred_check
      _
    $region35: #{tpu_custom_call.1} parent=1 // pred_check_branch
      %33 = sbr.rel (0) target = $region37
    $region36: #{tpu_custom_call.1} parent=1 // pred_region
      _
    $region37: #{tpu_custom_call.1} parent=1 // pred_fallthru
      _
    // Predicated region
    $region38: #{tpu_custom_call.1} parent=1 // pred_check
      _
    $region39: #{tpu_custom_call.1} parent=1 // pred_check_branch
      %35 = sbr.rel (0) target = $region41
    $region40: #{tpu_custom_call.1} parent=1 // pred_region
      _
    $region41: #{tpu_custom_call.1} parent=1 // pred_fallthru
      _
    %v36 = vld [vmem:[%s2] sm:$0xff]
    %v37 = vld [vmem:[%s2 + $0x8] sm:$0xff]
    %v38 = vld [vmem:[%s2 + $0x10] sm:$0xff]
    %v39 = vld [vmem:[%s2 + $0x18] sm:$0xff]
    %v40 = vld [vmem:[%s0] sm:$0xf]
    %v41 = vld [vmem:[%s3] sm:$0xff]
    %v42 = vld [vmem:[%s3 + $0x8] sm:$0xff]
    %v43 = vld [vmem:[%s3 + $0x10] sm:$0xff]
    %v44 = vld [vmem:[%s3 + $0x18] sm:$0xff]
    %46 = vset.pattern.permute.xlu0 0
    %47 = vperm.xlu0 %46, %v41
    %v48 = vpop.permute.xlu0 %47
    %51 = vset.pattern.permute.xlu0 0
    %52 = vperm.xlu0 %51, %v42
    %v53 = vpop.permute.xlu0 %52
    %56 = vset.pattern.permute.xlu0 0
    %57 = vperm.xlu0 %56, %v43
    %v58 = vpop.permute.xlu0 %57
    %61 = vset.pattern.permute.xlu0 0
    %62 = vperm.xlu0 %61, %v44
    %v63 = vpop.permute.xlu0 %62
    %vm65 = vcmask 31744
    %v67 = vsel %vm65, %v36, 0
    %v70 = vsel %vm65, %v37, 0
    %v73 = vsel %vm65, %v38, 0
    %v76 = vsel %vm65, %v39, 0
    %vm78 = vcmask 1043456
    %v80 = vsel %vm78, %v40, 0
    %82 = vmatprep.subr.mxu0 0.0
    %83 = vmatpush1.msra.mxu0 %v80
    %84 = vmatprep.subr.mxu0 0.0
    %85 = vmatpush1.msra.mxu0 0.0
    %86 = vmatprep.subr.mxu0 0.0
    %87 = vmatpush1.msra.mxu0 0.0
    %88 = vmatprep.subr.mxu0 0.0
    %89 = vmatpush1.msra.mxu0 0.0
    %90 = vmatprep.subr.mxu0 0.0
    %91 = vmatpush1.msra.mxu0 0.0
    %92 = vmatprep.subr.mxu0 0.0
    %93 = vmatpush1.msra.mxu0 0.0
    %94 = vmatprep.subr.mxu0 0.0
    %95 = vmatpush1.msra.mxu0 0.0
    %96 = vmatprep.subr.mxu0 0.0
    %97 = vmatpush1.msra.mxu0 0.0
    %98 = vmatprep.subr.mxu0 0.0
    %99 = vmatpush1.msra.mxu0 0.0
    %100 = vmatprep.subr.mxu0 0.0
    %101 = vmatpush1.msra.mxu0 0.0
    %102 = vmatprep.subr.mxu0 0.0
    %103 = vmatpush1.msra.mxu0 0.0
    %104 = vmatprep.subr.mxu0 0.0
    %105 = vmatpush1.msra.mxu0 0.0
    %106 = vmatprep.subr.mxu0 0.0
    %107 = vmatpush1.msra.mxu0 0.0
    %108 = vmatprep.subr.mxu0 0.0
    %109 = vmatpush1.msra.mxu0 0.0
    %110 = vmatprep.subr.mxu0 0.0
    %111 = vmatpush1.msra.mxu0 0.0
    %112 = vmatprep.subr.mxu0 0.0
    %113 = vmatpush1.msra.mxu0 0.0
    %114 = vmatprep.subr.mxu0 0.0
    %115 = vmatpush1.msra.mxu0 0.0
    %116 = vmatprep.subr.mxu0 0.0
    %117 = vmatpush1.msra.mxu0 0.0
    %118 = vmatprep.subr.mxu0 0.0
    %119 = vmatpush1.msra.mxu0 0.0
    %120 = vmatprep.subr.mxu0 0.0
    %121 = vmatpush1.msra.mxu0 0.0
    %122 = vmatprep.subr.mxu0 0.0
    %123 = vmatpush1.msra.mxu0 0.0
    %124 = vmatprep.subr.mxu0 0.0
    %125 = vmatpush1.msra.mxu0 0.0
    %126 = vmatprep.subr.mxu0 0.0
    %127 = vmatpush1.msra.mxu0 0.0
    %128 = vmatprep.subr.mxu0 0.0
    %129 = vmatpush1.msra.mxu0 0.0
    %130 = vmatprep.subr.mxu0 0.0
    %131 = vmatpush1.msra.mxu0 0.0
    %132 = vmatprep.subr.mxu0 0.0
    %133 = vmatpush1.msra.mxu0 0.0
    %134 = vmatprep.subr.mxu0 0.0
    %135 = vmatpush1.msra.mxu0 0.0
    %136 = vmatprep.subr.mxu0 0.0
    %137 = vmatpush1.msra.mxu0 0.0
    %138 = vmatprep.subr.mxu0 0.0
    %139 = vmatpush1.msra.mxu0 0.0
    %140 = vmatprep.subr.mxu0 0.0
    %141 = vmatpush1.msra.mxu0 0.0
    %142 = vmatprep.subr.mxu0 0.0
    %143 = vmatpush1.msra.mxu0 0.0
    %144 = vmatprep.subr.mxu0 0.0
    %145 = vmatpush1.msra.mxu0 0.0
    %146 = vmatprep.mubr.f32.mxu0 0.0
    %147 = vmatmul.mubr.f32.gmra.mrb[0].mxu0 %v67
    %v148 = vpop.f32.mrb[0].mxu0
    %v149 = vadd.f32 %v48, %v148
    %v150 = vpop.f32.mrb[0].mxu0
    %151 = vmatprep.mubr.f32.mxu0 0.0
    %152 = vmatmul.mubr.f32.gmra.mrb[0].mxu0 %v70
    %v153 = vpop.f32.mrb[0].mxu0
    %v154 = vadd.f32 %v53, %v153
    %v155 = vpop.f32.mrb[0].mxu0
    %156 = vmatprep.mubr.f32.mxu0 0.0
    %157 = vmatmul.mubr.f32.gmra.mrb[0].mxu0 %v73
    %v158 = vpop.f32.mrb[0].mxu0
    %v159 = vadd.f32 %v58, %v158
    %v160 = vpop.f32.mrb[0].mxu0
    %161 = vmatprep.mubr.f32.mxu0 0.0
    %162 = vmatmul.mubr.f32.gmra.mrb[0].mxu0 %v76
    %v163 = vpop.f32.mrb[0].mxu0
    %v164 = vadd.f32 %v63, %v163
    %v165 = vpop.f32.mrb[0].mxu0
    %166 = vdwg.mxu0
    %v167 = vmul.f32 %v149, 0.5
    %v168 = vmul.f32 %v154, 0.5
    %v169 = vmul.f32 %v159, 0.5
    %v170 = vmul.f32 %v164, 0.5
    %v171 = vmul.f32 %v149, 0.70710677
    %v172 = vmul.f32 %v154, 0.70710677
    %v173 = vmul.f32 %v159, 0.70710677
    %v174 = vmul.f32 %v164, 0.70710677
    %vm175 = vcmp.ge.f32.partialorder %v171, 0.0
    %vm176 = vcmp.ge.f32.partialorder %v172, 0.0
    %vm177 = vcmp.ge.f32.partialorder %v173, 0.0
    %vm178 = vcmp.ge.f32.partialorder %v174, 0.0
    %v179 = vsel %vm175, 1.0, -1.0
    %v180 = vsel %vm176, 1.0, -1.0
    %v181 = vsel %vm177, 1.0, -1.0
    %v182 = vsel %vm178, 1.0, -1.0
    %v183 = vand.u32 2147483647, %v171
    %v184 = vand.u32 2147483647, %v172
    %v185 = vand.u32 2147483647, %v173
    %v186 = vand.u32 2147483647, %v174
    %v187 = vmul.f32 %v183, 0.3275911
    %v188 = vmul.f32 %v184, 0.3275911
    %v189 = vmul.f32 %v185, 0.3275911
    %v190 = vmul.f32 %v186, 0.3275911
    %v191 = vadd.f32 %v187, 1.0
    %v192 = vadd.f32 %v188, 1.0
    %v193 = vadd.f32 %v189, 1.0
    %v194 = vadd.f32 %v190, 1.0
    %v195 = vrcp.pop %v191
    %v196 = vrcp.pop %v192
    %v197 = vrcp.pop %v193
    %v198 = vrcp.pop %v194
    %v199 = vmul.f32 %v191, %v195
    %v200 = vmul.f32 %v192, %v196
    %v201 = vmul.f32 %v193, %v197
    %v202 = vmul.f32 %v194, %v198
    %v203 = vsub.f32 2.0, %v199
    %v204 = vsub.f32 2.0, %v200
    %v205 = vsub.f32 2.0, %v201
    %v206 = vsub.f32 2.0, %v202
    %v207 = vmul.f32 %v195, %v203
    %v208 = vmul.f32 %v196, %v204
    %v209 = vmul.f32 %v197, %v205
    %v210 = vmul.f32 %v198, %v206
    %v211 = vmul.f32 %v207, 1.0614054
    %v212 = vmul.f32 %v208, 1.0614054
    %v213 = vmul.f32 %v209, 1.0614054
    %v214 = vmul.f32 %v210, 1.0614054
    %v215 = vadd.f32 %v211, -1.4531521
    %v216 = vadd.f32 %v212, -1.4531521
    %v217 = vadd.f32 %v213, -1.4531521
    %v218 = vadd.f32 %v214, -1.4531521
    %v219 = vmul.f32 %v215, %v207
    %v220 = vmul.f32 %v216, %v208
    %v221 = vmul.f32 %v217, %v209
    %v222 = vmul.f32 %v218, %v210
    %v223 = vadd.f32 %v219, 1.4214138
    %v224 = vadd.f32 %v220, 1.4214138
    %v225 = vadd.f32 %v221, 1.4214138
    %v226 = vadd.f32 %v222, 1.4214138
    %v227 = vmul.f32 %v223, %v207
    %v228 = vmul.f32 %v224, %v208
    %v229 = vmul.f32 %v225, %v209
    %v230 = vmul.f32 %v226, %v210
    %v231 = vadd.f32 %v227, -0.28449672
    %v232 = vadd.f32 %v228, -0.28449672
    %v233 = vadd.f32 %v229, -0.28449672
    %v234 = vadd.f32 %v230, -0.28449672
    %v235 = vmul.f32 %v231, %v207
    %v236 = vmul.f32 %v232, %v208
    %v237 = vmul.f32 %v233, %v209
    %v238 = vmul.f32 %v234, %v210
    %v239 = vadd.f32 %v235, 0.2548296
    %v240 = vadd.f32 %v236, 0.2548296
    %v241 = vadd.f32 %v237, 0.2548296
    %v242 = vadd.f32 %v238, 0.2548296
    %v243 = vmul.f32 %v239, %v207
    %v244 = vmul.f32 %v240, %v208
    %v245 = vmul.f32 %v241, %v209
    %v246 = vmul.f32 %v242, %v210
    %v247 = vsub.f32 0.0, %v183
    %v248 = vsub.f32 0.0, %v184
    %v249 = vsub.f32 0.0, %v185
    %v250 = vsub.f32 0.0, %v186
    %v251 = vmul.f32 %v247, %v183
    %v252 = vmul.f32 %v248, %v184
    %v253 = vmul.f32 %v249, %v185
    %v254 = vmul.f32 %v250, %v186
    %v255 = vmul.f32 %v251, 1.442695
    %v256 = vpow.pop %v255
    %v257 = vmul.f32 %v252, 1.442695
    %v258 = vpow.pop %v257
    %v259 = vmul.f32 %v253, 1.442695
    %v260 = vpow.pop %v259
    %v261 = vmul.f32 %v254, 1.442695
    %v262 = vpow.pop %v261
    %v263 = vmul.f32 %v243, %v256
    %v264 = vmul.f32 %v244, %v258
    %v265 = vmul.f32 %v245, %v260
    %v266 = vmul.f32 %v246, %v262
    %v267 = vsub.f32 1.0, %v263
    %v268 = vsub.f32 1.0, %v264
    %v269 = vsub.f32 1.0, %v265
    %v270 = vsub.f32 1.0, %v266
    %v271 = vmul.f32 %v179, %v267
    %v272 = vmul.f32 %v180, %v268
    %v273 = vmul.f32 %v181, %v269
    %v274 = vmul.f32 %v182, %v270
    %v275 = vadd.f32 %v271, 1.0
    %v276 = vadd.f32 %v272, 1.0
    %v277 = vadd.f32 %v273, 1.0
    %v278 = vadd.f32 %v274, 1.0
    %v279 = vmul.f32 %v167, %v275
    %v280 = vmul.f32 %v168, %v276
    %v281 = vmul.f32 %v169, %v277
    %v282 = vmul.f32 %v170, %v278
    %v283 = vld [vmem:[%s4] sm:$0xff]
    %v284 = vld [vmem:[%s4 + $0x8] sm:$0xff]
    %v285 = vld [vmem:[%s4 + $0x10] sm:$0xff]
    %v286 = vld [vmem:[%s4 + $0x18] sm:$0xff]
    %v287 = vld [vmem:[%s5] sm:$0xff]
    %v288 = vld [vmem:[%s5 + $0x8] sm:$0xff]
    %v289 = vld [vmem:[%s5 + $0x10] sm:$0xff]
    %v290 = vld [vmem:[%s5 + $0x18] sm:$0xff]
    %292 = vset.pattern.permute.xlu0 0
    %293 = vperm.xlu0 %292, %v287
    %v294 = vpop.permute.xlu0 %293
    %297 = vset.pattern.permute.xlu0 0
    %298 = vperm.xlu0 %297, %v288
    %v299 = vpop.permute.xlu0 %298
    %302 = vset.pattern.permute.xlu0 0
    %303 = vperm.xlu0 %302, %v289
    %v304 = vpop.permute.xlu0 %303
    %307 = vset.pattern.permute.xlu0 0
    %308 = vperm.xlu0 %307, %v290
    %v309 = vpop.permute.xlu0 %308
    %vm311 = vcmask 261120
    %v313 = vsel %vm311, %v283, 0
    %v316 = vsel %vm311, %v284, 0
    %v319 = vsel %vm311, %v285, 0
    %v322 = vsel %vm311, %v286, 0
    %324 = vmatprep.subr.mxu0 0.0
    %325 = vmatpush1.msra.mxu0 %v279
    %326 = vmatprep.subr.mxu0 0.0
    %327 = vmatpush1.msra.mxu0 %v280
    %328 = vmatprep.subr.mxu0 0.0
    %329 = vmatpush1.msra.mxu0 %v281
    %330 = vmatprep.subr.mxu0 0.0
    %331 = vmatpush1.msra.mxu0 %v282
    %332 = vmatprep.subr.mxu0 0.0
    %333 = vmatpush1.msra.mxu0 0.0
    %334 = vmatprep.subr.mxu0 0.0
    %335 = vmatpush1.msra.mxu0 0.0
    %336 = vmatprep.subr.mxu0 0.0
    %337 = vmatpush1.msra.mxu0 0.0
    %338 = vmatprep.subr.mxu0 0.0
    %339 = vmatpush1.msra.mxu0 0.0
    %340 = vmatprep.subr.mxu0 0.0
    %341 = vmatpush1.msra.mxu0 0.0
    %342 = vmatprep.subr.mxu0 0.0
    %343 = vmatpush1.msra.mxu0 0.0
    %344 = vmatprep.subr.mxu0 0.0
    %345 = vmatpush1.msra.mxu0 0.0
    %346 = vmatprep.subr.mxu0 0.0
    %347 = vmatpush1.msra.mxu0 0.0
    %348 = vmatprep.subr.mxu0 0.0
    %349 = vmatpush1.msra.mxu0 0.0
    %350 = vmatprep.subr.mxu0 0.0
    %351 = vmatpush1.msra.mxu0 0.0
    %352 = vmatprep.subr.mxu0 0.0
    %353 = vmatpush1.msra.mxu0 0.0
    %354 = vmatprep.subr.mxu0 0.0
    %355 = vmatpush1.msra.mxu0 0.0
    %356 = vmatprep.subr.mxu0 0.0
    %357 = vmatpush1.msra.mxu0 0.0
    %358 = vmatprep.subr.mxu0 0.0
    %359 = vmatpush1.msra.mxu0 0.0
    %360 = vmatprep.subr.mxu0 0.0
    %361 = vmatpush1.msra.mxu0 0.0
    %362 = vmatprep.subr.mxu0 0.0
    %363 = vmatpush1.msra.mxu0 0.0
    %364 = vmatprep.subr.mxu0 0.0
    %365 = vmatpush1.msra.mxu0 0.0
    %366 = vmatprep.subr.mxu0 0.0
    %367 = vmatpush1.msra.mxu0 0.0
    %368 = vmatprep.subr.mxu0 0.0
    %369 = vmatpush1.msra.mxu0 0.0
    %370 = vmatprep.subr.mxu0 0.0
    %371 = vmatpush1.msra.mxu0 0.0
    %372 = vmatprep.subr.mxu0 0.0
    %373 = vmatpush1.msra.mxu0 0.0
    %374 = vmatprep.subr.mxu0 0.0
    %375 = vmatpush1.msra.mxu0 0.0
    %376 = vmatprep.subr.mxu0 0.0
    %377 = vmatpush1.msra.mxu0 0.0
    %378 = vmatprep.subr.mxu0 0.0
    %379 = vmatpush1.msra.mxu0 0.0
    %380 = vmatprep.subr.mxu0 0.0
    %381 = vmatpush1.msra.mxu0 0.0
    %382 = vmatprep.subr.mxu0 0.0
    %383 = vmatpush1.msra.mxu0 0.0
    %384 = vmatprep.subr.mxu0 0.0
    %385 = vmatpush1.msra.mxu0 0.0
    %386 = vmatprep.subr.mxu0 0.0
    %387 = vmatpush1.msra.mxu0 0.0
    %388 = vmatprep.mubr.f32.mxu0 0.0
    %389 = vmatmul.mubr.f32.gmra.mrb[0].mxu0 %v313
    %v390 = vpop.f32.mrb[0].mxu0
    %v391 = vadd.f32 %v294, %v390
    %v392 = vpop.f32.mrb[0].mxu0
    %393 = vmatprep.mubr.f32.mxu0 0.0
    %394 = vmatmul.mubr.f32.gmra.mrb[0].mxu0 %v316
    %v395 = vpop.f32.mrb[0].mxu0
    %v396 = vadd.f32 %v299, %v395
    %v397 = vpop.f32.mrb[0].mxu0
    %398 = vmatprep.mubr.f32.mxu0 0.0
    %399 = vmatmul.mubr.f32.gmra.mrb[0].mxu0 %v319
    %v400 = vpop.f32.mrb[0].mxu0
    %v401 = vadd.f32 %v304, %v400
    %v402 = vpop.f32.mrb[0].mxu0
    %403 = vmatprep.mubr.f32.mxu0 0.0
    %404 = vmatmul.mubr.f32.gmra.mrb[0].mxu0 %v322
    %v405 = vpop.f32.mrb[0].mxu0
    %v406 = vadd.f32 %v309, %v405
    %v407 = vpop.f32.mrb[0].mxu0
    %408 = vdwg.mxu0
    %v409 = vmul.f32 %v391, 0.5
    %v410 = vmul.f32 %v396, 0.5
    %v411 = vmul.f32 %v401, 0.5
    %v412 = vmul.f32 %v406, 0.5
    %v413 = vmul.f32 %v391, 0.70710677
    %v414 = vmul.f32 %v396, 0.70710677
    %v415 = vmul.f32 %v401, 0.70710677
    %v416 = vmul.f32 %v406, 0.70710677
    %vm417 = vcmp.ge.f32.partialorder %v413, 0.0
    %vm418 = vcmp.ge.f32.partialorder %v414, 0.0
    %vm419 = vcmp.ge.f32.partialorder %v415, 0.0
    %vm420 = vcmp.ge.f32.partialorder %v416, 0.0
    %v421 = vsel %vm417, 1.0, -1.0
    %v422 = vsel %vm418, 1.0, -1.0
    %v423 = vsel %vm419, 1.0, -1.0
    %v424 = vsel %vm420, 1.0, -1.0
    %v425 = vand.u32 2147483647, %v413
    %v426 = vand.u32 2147483647, %v414
    %v427 = vand.u32 2147483647, %v415
    %v428 = vand.u32 2147483647, %v416
    %v429 = vmul.f32 %v425, 0.3275911
    %v430 = vmul.f32 %v426, 0.3275911
    %v431 = vmul.f32 %v427, 0.3275911
    %v432 = vmul.f32 %v428, 0.3275911
    %v433 = vadd.f32 %v429, 1.0
    %v434 = vadd.f32 %v430, 1.0
    %v435 = vadd.f32 %v431, 1.0
    %v436 = vadd.f32 %v432, 1.0
    %v437 = vrcp.pop %v433
    %v438 = vrcp.pop %v434
    %v439 = vrcp.pop %v435
    %v440 = vrcp.pop %v436
    %v441 = vmul.f32 %v433, %v437
    %v442 = vmul.f32 %v434, %v438
    %v443 = vmul.f32 %v435, %v439
    %v444 = vmul.f32 %v436, %v440
    %v445 = vsub.f32 2.0, %v441
    %v446 = vsub.f32 2.0, %v442
    %v447 = vsub.f32 2.0, %v443
    %v448 = vsub.f32 2.0, %v444
    %v449 = vmul.f32 %v437, %v445
    %v450 = vmul.f32 %v438, %v446
    %v451 = vmul.f32 %v439, %v447
    %v452 = vmul.f32 %v440, %v448
    %v453 = vmul.f32 %v449, 1.0614054
    %v454 = vmul.f32 %v450, 1.0614054
    %v455 = vmul.f32 %v451, 1.0614054
    %v456 = vmul.f32 %v452, 1.0614054
    %v457 = vadd.f32 %v453, -1.4531521
    %v458 = vadd.f32 %v454, -1.4531521
    %v459 = vadd.f32 %v455, -1.4531521
    %v460 = vadd.f32 %v456, -1.4531521
    %v461 = vmul.f32 %v457, %v449
    %v462 = vmul.f32 %v458, %v450
    %v463 = vmul.f32 %v459, %v451
    %v464 = vmul.f32 %v460, %v452
    %v465 = vadd.f32 %v461, 1.4214138
    %v466 = vadd.f32 %v462, 1.4214138
    %v467 = vadd.f32 %v463, 1.4214138
    %v468 = vadd.f32 %v464, 1.4214138
    %v469 = vmul.f32 %v465, %v449
    %v470 = vmul.f32 %v466, %v450
    %v471 = vmul.f32 %v467, %v451
    %v472 = vmul.f32 %v468, %v452
    %v473 = vadd.f32 %v469, -0.28449672
    %v474 = vadd.f32 %v470, -0.28449672
    %v475 = vadd.f32 %v471, -0.28449672
    %v476 = vadd.f32 %v472, -0.28449672
    %v477 = vmul.f32 %v473, %v449
    %v478 = vmul.f32 %v474, %v450
    %v479 = vmul.f32 %v475, %v451
    %v480 = vmul.f32 %v476, %v452
    %v481 = vadd.f32 %v477, 0.2548296
    %v482 = vadd.f32 %v478, 0.2548296
    %v483 = vadd.f32 %v479, 0.2548296
    %v484 = vadd.f32 %v480, 0.2548296
    %v485 = vmul.f32 %v481, %v449
    %v486 = vmul.f32 %v482, %v450
    %v487 = vmul.f32 %v483, %v451
    %v488 = vmul.f32 %v484, %v452
    %v489 = vsub.f32 0.0, %v425
    %v490 = vsub.f32 0.0, %v426
    %v491 = vsub.f32 0.0, %v427
    %v492 = vsub.f32 0.0, %v428
    %v493 = vmul.f32 %v489, %v425
    %v494 = vmul.f32 %v490, %v426
    %v495 = vmul.f32 %v491, %v427
    %v496 = vmul.f32 %v492, %v428
    %v497 = vmul.f32 %v493, 1.442695
    %v498 = vpow.pop %v497
    %v499 = vmul.f32 %v494, 1.442695
    %v500 = vpow.pop %v499
    %v501 = vmul.f32 %v495, 1.442695
    %v502 = vpow.pop %v501
    %v503 = vmul.f32 %v496, 1.442695
    %v504 = vpow.pop %v503
    %v505 = vmul.f32 %v485, %v498
    %v506 = vmul.f32 %v486, %v500
    %v507 = vmul.f32 %v487, %v502
    %v508 = vmul.f32 %v488, %v504
    %v509 = vsub.f32 1.0, %v505
    %v510 = vsub.f32 1.0, %v506
    %v511 = vsub.f32 1.0, %v507
    %v512 = vsub.f32 1.0, %v508
    %v513 = vmul.f32 %v421, %v509
    %v514 = vmul.f32 %v422, %v510
    %v515 = vmul.f32 %v423, %v511
    %v516 = vmul.f32 %v424, %v512
    %v517 = vadd.f32 %v513, 1.0
    %v518 = vadd.f32 %v514, 1.0
    %v519 = vadd.f32 %v515, 1.0
    %v520 = vadd.f32 %v516, 1.0
    %v521 = vmul.f32 %v409, %v517
    %v522 = vmul.f32 %v410, %v518
    %v523 = vmul.f32 %v411, %v519
    %v524 = vmul.f32 %v412, %v520
    %v525 = vld [vmem:[%s6] sm:$0xf]
    %v526 = vld [vmem:[%s7] sm:$0xf]
    %528 = vset.pattern.permute.xlu0 0
    %529 = vperm.xlu0 %528, %v526
    %v530 = vpop.permute.xlu0 %529
    %v533 = vsel %vm311, %v525, 0
    %535 = vmatprep.subr.mxu0 0.0
    %536 = vmatpush1.msra.mxu0 %v521
    %537 = vmatprep.subr.mxu0 0.0
    %538 = vmatpush1.msra.mxu0 %v522
    %539 = vmatprep.subr.mxu0 0.0
    %540 = vmatpush1.msra.mxu0 %v523
    %541 = vmatprep.subr.mxu0 0.0
    %542 = vmatpush1.msra.mxu0 %v524
    %543 = vmatprep.subr.mxu0 0.0
    %544 = vmatpush1.msra.mxu0 0.0
    %545 = vmatprep.subr.mxu0 0.0
    %546 = vmatpush1.msra.mxu0 0.0
    %547 = vmatprep.subr.mxu0 0.0
    %548 = vmatpush1.msra.mxu0 0.0
    %549 = vmatprep.subr.mxu0 0.0
    %550 = vmatpush1.msra.mxu0 0.0
    %551 = vmatprep.subr.mxu0 0.0
    %552 = vmatpush1.msra.mxu0 0.0
    %553 = vmatprep.subr.mxu0 0.0
    %554 = vmatpush1.msra.mxu0 0.0
    %555 = vmatprep.subr.mxu0 0.0
    %556 = vmatpush1.msra.mxu0 0.0
    %557 = vmatprep.subr.mxu0 0.0
    %558 = vmatpush1.msra.mxu0 0.0
    %559 = vmatprep.subr.mxu0 0.0
    %560 = vmatpush1.msra.mxu0 0.0
    %561 = vmatprep.subr.mxu0 0.0
    %562 = vmatpush1.msra.mxu0 0.0
    %563 = vmatprep.subr.mxu0 0.0
    %564 = vmatpush1.msra.mxu0 0.0
    %565 = vmatprep.subr.mxu0 0.0
    %566 = vmatpush1.msra.mxu0 0.0
    %567 = vmatprep.subr.mxu0 0.0
    %568 = vmatpush1.msra.mxu0 0.0
    %569 = vmatprep.subr.mxu0 0.0
    %570 = vmatpush1.msra.mxu0 0.0
    %571 = vmatprep.subr.mxu0 0.0
    %572 = vmatpush1.msra.mxu0 0.0
    %573 = vmatprep.subr.mxu0 0.0
    %574 = vmatpush1.msra.mxu0 0.0
    %575 = vmatprep.subr.mxu0 0.0
    %576 = vmatpush1.msra.mxu0 0.0
    %577 = vmatprep.subr.mxu0 0.0
    %578 = vmatpush1.msra.mxu0 0.0
    %579 = vmatprep.subr.mxu0 0.0
    %580 = vmatpush1.msra.mxu0 0.0
    %581 = vmatprep.subr.mxu0 0.0
    %582 = vmatpush1.msra.mxu0 0.0
    %583 = vmatprep.subr.mxu0 0.0
    %584 = vmatpush1.msra.mxu0 0.0
    %585 = vmatprep.subr.mxu0 0.0
    %586 = vmatpush1.msra.mxu0 0.0
    %587 = vmatprep.subr.mxu0 0.0
    %588 = vmatpush1.msra.mxu0 0.0
    %589 = vmatprep.subr.mxu0 0.0
    %590 = vmatpush1.msra.mxu0 0.0
    %591 = vmatprep.subr.mxu0 0.0
    %592 = vmatpush1.msra.mxu0 0.0
    %593 = vmatprep.subr.mxu0 0.0
    %594 = vmatpush1.msra.mxu0 0.0
    %595 = vmatprep.subr.mxu0 0.0
    %596 = vmatpush1.msra.mxu0 0.0
    %597 = vmatprep.subr.mxu0 0.0
    %598 = vmatpush1.msra.mxu0 0.0
    %599 = vmatprep.mubr.f32.mxu0 0.0
    %600 = vmatmul.mubr.f32.gmra.mrb[0].mxu0 %v533
    %v601 = vpop.f32.mrb[0].mxu0
    %v602 = vadd.f32 %v530, %v601
    %v603 = vpop.f32.mrb[0].mxu0
    %604 = vdwg.mxu0
    %v605 = vld [vmem:[%s1] sm:$0x3]
    %v606 = vld [vmem:[%s8] sm:$0xf]
    %v607 = vld [vmem:[%s9] sm:$0xf]
    %609 = vset.pattern.permute.xlu0 0
    %610 = vperm.xlu0 %609, %v607
    %v611 = vpop.permute.xlu0 %610
    %v614 = vsel %vm311, %v606, 0
    %616 = vmatprep.subr.mxu0 0.0
    %617 = vmatpush1.msra.mxu0 %v521
    %618 = vmatprep.subr.mxu0 0.0
    %619 = vmatpush1.msra.mxu0 %v522
    %620 = vmatprep.subr.mxu0 0.0
    %621 = vmatpush1.msra.mxu0 %v523
    %622 = vmatprep.subr.mxu0 0.0
    %623 = vmatpush1.msra.mxu0 %v524
    %624 = vmatprep.subr.mxu0 0.0
    %625 = vmatpush1.msra.mxu0 0.0
    %626 = vmatprep.subr.mxu0 0.0
    %627 = vmatpush1.msra.mxu0 0.0
    %628 = vmatprep.subr.mxu0 0.0
    %629 = vmatpush1.msra.mxu0 0.0
    %630 = vmatprep.subr.mxu0 0.0
    %631 = vmatpush1.msra.mxu0 0.0
    %632 = vmatprep.subr.mxu0 0.0
    %633 = vmatpush1.msra.mxu0 0.0
    %634 = vmatprep.subr.mxu0 0.0
    %635 = vmatpush1.msra.mxu0 0.0
    %636 = vmatprep.subr.mxu0 0.0
    %637 = vmatpush1.msra.mxu0 0.0
    %638 = vmatprep.subr.mxu0 0.0
    %639 = vmatpush1.msra.mxu0 0.0
    %640 = vmatprep.subr.mxu0 0.0
    %641 = vmatpush1.msra.mxu0 0.0
    %642 = vmatprep.subr.mxu0 0.0
    %643 = vmatpush1.msra.mxu0 0.0
    %644 = vmatprep.subr.mxu0 0.0
    %645 = vmatpush1.msra.mxu0 0.0
    %646 = vmatprep.subr.mxu0 0.0
    %647 = vmatpush1.msra.mxu0 0.0
    %648 = vmatprep.subr.mxu0 0.0
    %649 = vmatpush1.msra.mxu0 0.0
    %650 = vmatprep.subr.mxu0 0.0
    %651 = vmatpush1.msra.mxu0 0.0
    %652 = vmatprep.subr.mxu0 0.0
    %653 = vmatpush1.msra.mxu0 0.0
    %654 = vmatprep.subr.mxu0 0.0
    %655 = vmatpush1.msra.mxu0 0.0
    %656 = vmatprep.subr.mxu0 0.0
    %657 = vmatpush1.msra.mxu0 0.0
    %658 = vmatprep.subr.mxu0 0.0
    %659 = vmatpush1.msra.mxu0 0.0
    %660 = vmatprep.subr.mxu0 0.0
    %661 = vmatpush1.msra.mxu0 0.0
    %662 = vmatprep.subr.mxu0 0.0
    %663 = vmatpush1.msra.mxu0 0.0
    %664 = vmatprep.subr.mxu0 0.0
    %665 = vmatpush1.msra.mxu0 0.0
    %666 = vmatprep.subr.mxu0 0.0
    %667 = vmatpush1.msra.mxu0 0.0
    %668 = vmatprep.subr.mxu0 0.0
    %669 = vmatpush1.msra.mxu0 0.0
    %670 = vmatprep.subr.mxu0 0.0
    %671 = vmatpush1.msra.mxu0 0.0
    %672 = vmatprep.subr.mxu0 0.0
    %673 = vmatpush1.msra.mxu0 0.0
    %674 = vmatprep.subr.mxu0 0.0
    %675 = vmatpush1.msra.mxu0 0.0
    %676 = vmatprep.subr.mxu0 0.0
    %677 = vmatpush1.msra.mxu0 0.0
    %678 = vmatprep.subr.mxu0 0.0
    %679 = vmatpush1.msra.mxu0 0.0
    %680 = vmatprep.mubr.f32.mxu0 0.0
    %681 = vmatmul.mubr.f32.gmra.mrb[0].mxu0 %v614
    %v682 = vpop.f32.mrb[0].mxu0
    %v683 = vadd.f32 %v611, %v682
    %v684 = vpop.f32.mrb[0].mxu0
    %685 = vdwg.mxu0
    %v686 = vlaneseq
    %v687 = vshrl.u32 %v686, 7
    %v688 = vsub.s32 0, %v687
    %v689 = vrot.slane %v605, %v688
    %v690 = vmul.f32 %v689, %v683
    %v691 = vadd.f32 %v602, %v690
    %s692 = scalar_lea.vmem %s8, 4
    %v693 = vld [vmem:[%s692] sm:$0xf]
    %s694 = scalar_lea.vmem %s9, 4
    %v695 = vld [vmem:[%s694] sm:$0xf]
    %697 = vset.pattern.permute.xlu0 0
    %698 = vperm.xlu0 %697, %v695
    %v699 = vpop.permute.xlu0 %698
    %v702 = vsel %vm311, %v693, 0
    %704 = vmatprep.subr.mxu0 0.0
    %705 = vmatpush1.msra.mxu0 %v521
    %706 = vmatprep.subr.mxu0 0.0
    %707 = vmatpush1.msra.mxu0 %v522
    %708 = vmatprep.subr.mxu0 0.0
    %709 = vmatpush1.msra.mxu0 %v523
    %710 = vmatprep.subr.mxu0 0.0
    %711 = vmatpush1.msra.mxu0 %v524
    %712 = vmatprep.subr.mxu0 0.0
    %713 = vmatpush1.msra.mxu0 0.0
    %714 = vmatprep.subr.mxu0 0.0
    %715 = vmatpush1.msra.mxu0 0.0
    %716 = vmatprep.subr.mxu0 0.0
    %717 = vmatpush1.msra.mxu0 0.0
    %718 = vmatprep.subr.mxu0 0.0
    %719 = vmatpush1.msra.mxu0 0.0
    %720 = vmatprep.subr.mxu0 0.0
    %721 = vmatpush1.msra.mxu0 0.0
    %722 = vmatprep.subr.mxu0 0.0
    %723 = vmatpush1.msra.mxu0 0.0
    %724 = vmatprep.subr.mxu0 0.0
    %725 = vmatpush1.msra.mxu0 0.0
    %726 = vmatprep.subr.mxu0 0.0
    %727 = vmatpush1.msra.mxu0 0.0
    %728 = vmatprep.subr.mxu0 0.0
    %729 = vmatpush1.msra.mxu0 0.0
    %730 = vmatprep.subr.mxu0 0.0
    %731 = vmatpush1.msra.mxu0 0.0
    %732 = vmatprep.subr.mxu0 0.0
    %733 = vmatpush1.msra.mxu0 0.0
    %734 = vmatprep.subr.mxu0 0.0
    %735 = vmatpush1.msra.mxu0 0.0
    %736 = vmatprep.subr.mxu0 0.0
    %737 = vmatpush1.msra.mxu0 0.0
    %738 = vmatprep.subr.mxu0 0.0
    %739 = vmatpush1.msra.mxu0 0.0
    %740 = vmatprep.subr.mxu0 0.0
    %741 = vmatpush1.msra.mxu0 0.0
    %742 = vmatprep.subr.mxu0 0.0
    %743 = vmatpush1.msra.mxu0 0.0
    %744 = vmatprep.subr.mxu0 0.0
    %745 = vmatpush1.msra.mxu0 0.0
    %746 = vmatprep.subr.mxu0 0.0
    %747 = vmatpush1.msra.mxu0 0.0
    %748 = vmatprep.subr.mxu0 0.0
    %749 = vmatpush1.msra.mxu0 0.0
    %750 = vmatprep.subr.mxu0 0.0
    %751 = vmatpush1.msra.mxu0 0.0
    %752 = vmatprep.subr.mxu0 0.0
    %753 = vmatpush1.msra.mxu0 0.0
    %754 = vmatprep.subr.mxu0 0.0
    %755 = vmatpush1.msra.mxu0 0.0
    %756 = vmatprep.subr.mxu0 0.0
    %757 = vmatpush1.msra.mxu0 0.0
    %758 = vmatprep.subr.mxu0 0.0
    %759 = vmatpush1.msra.mxu0 0.0
    %760 = vmatprep.subr.mxu0 0.0
    %761 = vmatpush1.msra.mxu0 0.0
    %762 = vmatprep.subr.mxu0 0.0
    %763 = vmatpush1.msra.mxu0 0.0
    %764 = vmatprep.subr.mxu0 0.0
    %765 = vmatpush1.msra.mxu0 0.0
    %766 = vmatprep.subr.mxu0 0.0
    %767 = vmatpush1.msra.mxu0 0.0
    %768 = vmatprep.mubr.f32.mxu0 0.0
    %769 = vmatmul.mubr.f32.gmra.mrb[0].mxu0 %v702
    %v770 = vpop.f32.mrb[0].mxu0
    %v771 = vadd.f32 %v699, %v770
    %v772 = vpop.f32.mrb[0].mxu0
    %773 = vdwg.mxu0
    %v774 = vlaneseq
    %v775 = vshrl.u32 %v774, 7
    %v776 = vsub.s32 1, %v775
    %v777 = vrot.slane %v605, %v776
    %v778 = vmul.f32 %v777, %v771
    %v779 = vadd.f32 %v691, %v778
    %780 = vst [vmem:[#allocation2] sm:$0xf] %v779
    // Predicated region
    $region42: #{tpu_custom_call.1} parent=1 // pred_check
      _
    $region43: #{tpu_custom_call.1} parent=1 // pred_check_branch
      %782 = sbr.rel (0) target = $region45
    $region44: #{tpu_custom_call.1} parent=1 // pred_region
      %s784 = ssub.s32 64, 64
      %785 = vsyncadd [#allocation3], %s784
      %s787 = sshll.u32 [#allocation2], 4
      %s788 = int_to_ptr.vmem [resolvable:$true] %s787
      %790 = dma.vmem_to_hbm [thread:$0]  %s788, 64, %s10, [#allocation3]
    $region45: #{tpu_custom_call.1} parent=1 // pred_fallthru
      _
    // Predicated region
    $region46: #{tpu_custom_call.1} parent=1 // pred_check
      _
    $region47: #{tpu_custom_call.1} parent=1 // pred_check_branch
      %792 = sbr.rel (0) target = $region49
    $region48: #{tpu_custom_call.1} parent=1 // pred_region
      %793 = dma.done [#allocation3], 64
    $region49: #{tpu_custom_call.1} parent=1 // pred_fallthru
      _
    %794 = vsyncpa [#allocation3], 1

</llo_original>
